<compile_context>
chip_gen: v7x
topology: tpu7x:2x2x1
jax: 0.10.0
libtpu: 0.0.40
codegen_flags: <defaults>
</compile_context>

<pallas_src>
import jax
import jax.numpy as jnp
from jax.experimental import pallas as pl
from jax.experimental.pallas import tpu as pltpu

IN_DIM = 1
HIDDEN = 20
OUT_DIM = 1

HIDDEN_PAD = 24   # multiple of 8 sublanes (was 32 -> 25% less VPU/XLU work)
LANE = 128        # lane width; batch is padded to a multiple of this
TB_MAX = 2048     # batch tile (multiple of 128); fits v7x 64 MiB VMEM with headroom


def mlp_kernel(x_ref, p_ref, b2_ref, o_ref):
    # x_ref : (1, TB)                 batch tile along lanes
    # p_ref : (3*HIDDEN_PAD, TB)      rows [0:H)=w1, [H:2H)=b1, [2H:3H)=w2,
    #                                 each already lane-broadcast to TB
    # b2_ref: (1, 1) in SMEM          output bias scalar
    # o_ref : (1, TB)
    x = x_ref[...]                                        # (1, TB)
    w1 = p_ref[0:HIDDEN_PAD, :]                           # (HIDDEN_PAD, TB)
    b1 = p_ref[HIDDEN_PAD:2 * HIDDEN_PAD, :]              # (HIDDEN_PAD, TB)
    w2 = p_ref[2 * HIDDEN_PAD:3 * HIDDEN_PAD, :]          # (HIDDEN_PAD, TB)

    # Layer 1 on the VPU: h[j, n] = relu(w1[j] * x[n] + b1[j])
    # (only remaining broadcast is the cheap sublane splat of x).
    h = jnp.maximum(w1 * x + b1, 0.0)                     # (HIDDEN_PAD, TB)

    # Layer 2: VPU multiply + XLU sublane reduce over the hidden axis.
    # Padded hidden rows have w1=b1=w2=0 -> contribute exactly 0.
    o = jnp.sum(h * w2, axis=0, keepdims=True) + b2_ref[0, 0]   # (1, TB)

    o_ref[...] = o.astype(o_ref.dtype)


def _tile_and_pad(batch):
    """Pick the batch tile TB (multiple of 128, capped) and padded batch."""
    b_aligned = ((batch + LANE - 1) // LANE) * LANE
    tb = min(TB_MAX, b_aligned)
    b_pad = ((b_aligned + tb - 1) // tb) * tb             # multiple of tb
    return tb, b_pad


def pack_params(w1, b1, w2, b2, tile):
    """Pack + lane-broadcast parameters into the kernel-resident layout.

    Call this ONCE (e.g. after each optimizer update), not per forward call.
    w1: (IN_DIM, HIDDEN), b1: (1, HIDDEN), w2: (HIDDEN, OUT_DIM), b2: (1, OUT_DIM)
    Returns (params (3*HIDDEN_PAD, tile) f32, b2 (1, 1) f32).
    """
    p = jnp.zeros((3 * HIDDEN_PAD, tile), jnp.float32)
    p = p.at[0:HIDDEN, :].set(
        jnp.broadcast_to(w1[0, :, None].astype(jnp.float32), (HIDDEN, tile)))
    p = p.at[HIDDEN_PAD:HIDDEN_PAD + HIDDEN, :].set(
        jnp.broadcast_to(b1[0, :, None].astype(jnp.float32), (HIDDEN, tile)))
    p = p.at[2 * HIDDEN_PAD:2 * HIDDEN_PAD + HIDDEN, :].set(
        jnp.broadcast_to(w2[:, 0:1].astype(jnp.float32), (HIDDEN, tile)))
    b2s = b2.reshape(1, 1).astype(jnp.float32)
    return p, b2s


def net_forward_packed(x_t, params, b2s):
    """Hot path. x_t: (1, B_pad) feature-major, params: (3*HIDDEN_PAD, TB), b2s: (1,1)."""
    b_pad = x_t.shape[1]
    tb = params.shape[1]
    grid = (b_pad // tb,)

    return pl.pallas_call(
        mlp_kernel,
        out_shape=jax.ShapeDtypeStruct((1, b_pad), jnp.float32),
        grid=grid,
        in_specs=[
            pl.BlockSpec((1, tb), lambda i: (0, i)),                # x tile
            pl.BlockSpec((3 * HIDDEN_PAD, tb), lambda i: (0, 0)),   # params (resident)
            pl.BlockSpec(memory_space=pltpu.MemorySpace.SMEM),      # b2 scalar
        ],
        out_specs=pl.BlockSpec((1, tb), lambda i: (0, i)),
        compiler_params=pltpu.CompilerParams(
            dimension_semantics=("parallel",),   # shards tiles across v7x's 2 TCs
        ),
    )(x_t, params, b2s)


def net_forward(x, w1, b1, w2, b2):
    """Drop-in forward: x (B, 1) -> (B, 1). Packs params internally (use
    pack_params + net_forward_packed directly to amortize packing across steps)."""
    B = x.shape[0]
    tb, b_pad = _tile_and_pad(B)

    # Single pad of the transposed input -> feature-major lane-dense (1, B_pad).
    x_t = jnp.pad(x.astype(jnp.float32).T, ((0, 0), (0, b_pad - B)))

    params, b2s = pack_params(w1, b1, w2, b2, tb)
    out_t = net_forward_packed(x_t, params, b2s)

    # Back to the PyTorch (B, 1) layout.
    return out_t[0, :B].reshape(B, OUT_DIM)


def init_params(key):
    """Deterministic init mimicking torch.nn.Linear default (uniform +/- 1/sqrt(fan_in)).
    Weights stored as (in, out) = transpose of torch's (out, in)."""
    k1, k2, k3, k4 = jax.random.split(key, 4)
    bound1 = 1.0 / (IN_DIM ** 0.5)
    bound2 = 1.0 / (HIDDEN ** 0.5)
    w1 = jax.random.uniform(k1, (IN_DIM, HIDDEN), jnp.float32, -bound1, bound1)
    b1 = jax.random.uniform(k2, (1, HIDDEN), jnp.float32, -bound1, bound1)
    w2 = jax.random.uniform(k3, (HIDDEN, OUT_DIM), jnp.float32, -bound2, bound2)
    b2 = jax.random.uniform(k4, (1, OUT_DIM), jnp.float32, -bound2, bound2)
    return w1, b1, w2, b2


if __name__ == "__main__":
    key = jax.random.PRNGKey(0)
    kx, kp = jax.random.split(key)

    # Same input as the original script: 100 points in [-1, 1], shape (100, 1).
    x = jnp.linspace(-1.0, 1.0, 100, dtype=jnp.float32).reshape(100, 1)

    w1, b1, w2, b2 = init_params(kp)

    # Amortized path: pack once, reuse packed buffers for every forward call.
    tb, b_pad = _tile_and_pad(x.shape[0])
    params, b2s = pack_params(w1, b1, w2, b2, tb)
    x_t = jnp.pad(x.T, ((0, 0), (0, b_pad - x.shape[0])))
    out_t = jax.block_until_ready(net_forward_packed(x_t, params, b2s))
    out = out_t[0, :x.shape[0]].reshape(-1, OUT_DIM)

    # Also exercise the drop-in wrapper.
    out2 = jax.block_until_ready(net_forward(x, w1, b1, w2, b2))

    # Pure-JAX reference check of the forward semantics.
    ref = jnp.maximum(x @ w1 + b1, 0.0) @ w2 + b2
    assert out.shape == (100, 1)
    assert jnp.allclose(out, ref, atol=1e-5, rtol=1e-5)
    assert jnp.allclose(out2, ref, atol=1e-5, rtol=1e-5)

    print("KERNEL_OK")
</pallas_src>

<mosaic_0001>
module attributes {stable_mosaic.version = 11 : i64} {
  func.func @mlp_kernel(%arg0: i32, %arg1: memref<1x128xf32, #tpu.memory_space<vmem>>, %arg2: memref<72x128xf32, #tpu.memory_space<vmem>>, %arg3: memref<1x1xf32, #tpu.memory_space<smem>>, %arg4: memref<1x128xf32, #tpu.memory_space<vmem>>) attributes {dimension_semantics = [#tpu.dimension_semantics<parallel>], iteration_bounds = array<i64: 1>, scalar_prefetch = 0 : i64, scratch_operands = 0 : i64, tpu.core_type = #tpu.core_type<tc>, window_params = [{transform_indices = @transform_0, window_bounds = array<i64: 1, 128>}, {pipeline_mode = #tpu.pipeline_mode<synchronous>, transform_indices = @transform_1, window_bounds = array<i64: 72, 128>}, {transform_indices = @transform_2, window_bounds = array<i64: 1, 1>}, {transform_indices = @transform_3, window_bounds = array<i64: 1, 128>}]} {
    %c0 = arith.constant 0 : index
    %c0_0 = arith.constant 0 : index
    %0 = vector.load %arg1[%c0, %c0_0] : memref<1x128xf32, #tpu.memory_space<vmem>>, vector<1x128xf32>
    %c0_1 = arith.constant 0 : index
    %c0_2 = arith.constant 0 : index
    %1 = vector.load %arg2[%c0_1, %c0_2] : memref<72x128xf32, #tpu.memory_space<vmem>>, vector<24x128xf32>
    %c24 = arith.constant 24 : index
    %c0_3 = arith.constant 0 : index
    %2 = vector.load %arg2[%c24, %c0_3] : memref<72x128xf32, #tpu.memory_space<vmem>>, vector<24x128xf32>
    %c48 = arith.constant 48 : index
    %c0_4 = arith.constant 0 : index
    %3 = vector.load %arg2[%c48, %c0_4] : memref<72x128xf32, #tpu.memory_space<vmem>>, vector<24x128xf32>
    %4 = vector.broadcast %0 : vector<1x128xf32> to vector<24x128xf32>
    %5 = arith.mulf %1, %4 : vector<24x128xf32>
    %6 = arith.addf %5, %2 : vector<24x128xf32>
    %cst = arith.constant 0.000000e+00 : f32
    %7 = vector.broadcast %cst : f32 to vector<24x128xf32>
    %8 = arith.maximumf %6, %7 : vector<24x128xf32>
    %9 = arith.mulf %8, %3 : vector<24x128xf32>
    %cst_5 = arith.constant dense<0.000000e+00> : vector<128xf32>
    %10 = vector.multi_reduction <add>, %9, %cst_5 [0] : vector<24x128xf32> to vector<128xf32>
    %11 = vector.shape_cast %10 : vector<128xf32> to vector<1x128xf32>
    %c0_6 = arith.constant 0 : index
    %c0_7 = arith.constant 0 : index
    %12 = memref.load %arg3[%c0_6, %c0_7] : memref<1x1xf32, #tpu.memory_space<smem>>
    %13 = vector.broadcast %12 : f32 to vector<1x128xf32>
    %14 = arith.addf %11, %13 : vector<1x128xf32>
    %c0_8 = arith.constant 0 : index
    %c0_9 = arith.constant 0 : index
    %15 = vector.load %arg4[%c0_8, %c0_9] : memref<1x128xf32, #tpu.memory_space<vmem>>, vector<1x128xf32>
    tpu.vector_store %arg4[%c0_8, %c0_9], %14 {strides = array<i32>} : memref<1x128xf32, #tpu.memory_space<vmem>>, vector<1x128xf32>,
    return
  }
  func.func @transform_0(%arg0: i32) -> (i32, i32) {
    %c0_i32 = arith.constant 0 : i32
    %c0_i32_0 = arith.constant 0 : i32
    return %c0_i32, %arg0 : i32, i32
  }
  func.func @transform_1(%arg0: i32) -> (i32, i32) {
    %c0_i32 = arith.constant 0 : i32
    %c0_i32_0 = arith.constant 0 : i32
    %c0_i32_1 = arith.constant 0 : i32
    return %c0_i32, %c0_i32_0 : i32, i32
  }
  func.func @transform_2(%arg0: i32) -> (i32, i32) {
    %c0_i32 = arith.constant 0 : i32
    %c0_i32_0 = arith.constant 0 : i32
    %c0_i32_1 = arith.constant 0 : i32
    return %c0_i32, %c0_i32_0 : i32, i32
  }
  func.func @transform_3(%arg0: i32) -> (i32, i32) {
    %c0_i32 = arith.constant 0 : i32
    %c0_i32_0 = arith.constant 0 : i32
    return %c0_i32, %arg0 : i32, i32
  }
}

</mosaic_0001>

<llo_original>
// kernel: tpu_custom_call.1
$region0: #{tpu_custom_call.1}
  #allocation0 [shape = 'u32[]', space=smem, size = 0x4, offset = 0x4, fixed_abs, tag = 'smem constant byte address 0x4 - core index']
  #allocation1 [shape = 'u32[144,128]{1,0:T(1,128)}', space=vmem, size = 0x12000, scoped, tag = 'internal scratch']
  #allocation2 [shape = 'f32[1,1]{1,0:T(1,128)S(6)}', space=smem, size = 0x200, scoped, tag = 'scoped memory for tpu_custom_call.1']
  %s0 = inlined_call_operand.vmem [shape: f32[1,128], index: 0, kind: input, shape index: {}]
  %s1 = inlined_call_operand.hbm [shape: f32[72,128], index: 1, kind: input, shape index: {}]
  %s2 = inlined_call_operand.<no memory space> [shape: f32[1,1], index: 2, kind: input, shape index: {}]
  %s3 = inlined_call_operand.hbm [shape: f32[1,128], index: 3, kind: output, shape index: {}]
  %s4 = sld [smem:[#allocation0]]
  $region26: #{tpu_custom_call.1} parent=0
    _
  %s6 = ssub.s32 1, %s4
  %s7 = scalar_select 0, %s6, %s4
  %8 = sst [smem:[#allocation2]] %s2
  $region1: #{tpu_custom_call.1} parent=0
    #allocation3 [shape = 'u8[36864]{0}', space=vmem, size = 0x9000, scoped, tag = 'input window, operand 1, single buffered']
    #allocation4 [shape = 's32[1]{0}', space=sflag, size = 0x4, scoped, tag = 'scoped memory for tpu_custom_call.1']
    #allocation5 [shape = 's32[1]{0}', space=sflag, size = 0x4, scoped, tag = 'scoped memory for tpu_custom_call.1']
    #allocation6 [shape = 'u8[512]{0}', space=vmem, size = 0x400, scoped, tag = 'output window, operand 0, single buffered']
    %9 = vsyncpa [#allocation4], 0
    %10 = vsyncpa [#allocation5], 0
    // Predicated region
    $region2: #{tpu_custom_call.1} parent=1 // pred_check
      _
    $region3: #{tpu_custom_call.1} parent=1 // pred_check_branch
      %12 = sbr.rel (0) target = $region5
    $region4: #{tpu_custom_call.1} parent=1 // pred_region
      _
    $region5: #{tpu_custom_call.1} parent=1 // pred_fallthru
      _
    // Predicated region
    $region6: #{tpu_custom_call.1} parent=1 // pred_check
      _
    $region7: #{tpu_custom_call.1} parent=1 // pred_check_branch
      %14 = sbr.rel (0) target = $region9
    $region8: #{tpu_custom_call.1} parent=1 // pred_region
      %s16 = ssub.s32 1152, 1152
      %17 = vsyncadd [#allocation4], %s16
      %s18 = sshll.u32 [#allocation3], 4
      %s19 = int_to_ptr.vmem [resolvable:$true] %s18
      %24 = dma.hbm_to_vmem [thread:$0]  %s1, 1152, %s19, [#allocation4], 128, 128, 8
    $region9: #{tpu_custom_call.1} parent=1 // pred_fallthru
      _
    // Predicated region
    $region10: #{tpu_custom_call.1} parent=1 // pred_check
      _
    $region11: #{tpu_custom_call.1} parent=1 // pred_check_branch
      %26 = sbr.rel (0) target = $region13
    $region12: #{tpu_custom_call.1} parent=1 // pred_region
      _
    $region13: #{tpu_custom_call.1} parent=1 // pred_fallthru
      _
    // Predicated region
    $region14: #{tpu_custom_call.1} parent=1 // pred_check
      _
    $region15: #{tpu_custom_call.1} parent=1 // pred_check_branch
      %28 = sbr.rel (0) target = $region17
    $region16: #{tpu_custom_call.1} parent=1 // pred_region
      %29 = dma.done [#allocation4], 1152
    $region17: #{tpu_custom_call.1} parent=1 // pred_fallthru
      _
    %v30 = vld [vmem:[%s0] sm:$0x1]
    %v31 = vld [vmem:[#allocation3] sm:$0xff]
    %v32 = vld [vmem:[#allocation3 + $0x8] sm:$0xff]
    %v33 = vld [vmem:[#allocation3 + $0x10] sm:$0xff]
    %v34 = vld [vmem:[#allocation3 + $0x18] sm:$0xff]
    %v35 = vld [vmem:[#allocation3 + $0x20] sm:$0xff]
    %v36 = vld [vmem:[#allocation3 + $0x28] sm:$0xff]
    %v37 = vld [vmem:[#allocation3 + $0x30] sm:$0xff]
    %v38 = vld [vmem:[#allocation3 + $0x38] sm:$0xff]
    %v39 = vld [vmem:[#allocation3 + $0x40] sm:$0xff]
    %v41 = vlaneseq
    %v42 = vshrl.u32 %v41, 7
    %v43 = vsub.s32 0, %v42
    %v44 = vrot.slane %v30, %v43
    %v46 = vmul.f32 %v31, %v44
    %v47 = vmul.f32 %v32, %v44
    %v48 = vmul.f32 %v33, %v44
    %v49 = vadd.f32 %v46, %v34
    %v50 = vadd.f32 %v47, %v35
    %v51 = vadd.f32 %v48, %v36
    %v52 = vmax.f32 %v49, 0.0
    %v53 = vmax.f32 %v50, 0.0
    %v54 = vmax.f32 %v51, 0.0
    %v55 = vmul.f32 %v52, %v37
    %v56 = vmul.f32 %v53, %v38
    %v57 = vmul.f32 %v54, %v39
    %v58 = vadd.f32 %v55, %v56
    %v59 = vadd.f32 %v58, %v57
    %v60 = vrot.slane %v59, 4
    %v61 = vadd.f32 %v59, %v60
    %v62 = vrot.slane %v61, 2
    %v63 = vadd.f32 %v61, %v62
    %v64 = vrot.slane %v63, 1
    %v65 = vadd.f32 %v63, %v64
    %s66 = sld [smem:[#allocation2]]
    %v67 = vstv %s66
    %v68 = vadd.f32 %v65, %v67
    %69 = vst [vmem:[#allocation6] sm:$0x1] %v68
    // Predicated region
    $region18: #{tpu_custom_call.1} parent=1 // pred_check
      _
    $region19: #{tpu_custom_call.1} parent=1 // pred_check_branch
      %71 = sbr.rel (0) target = $region21
    $region20: #{tpu_custom_call.1} parent=1 // pred_region
      %s73 = ssub.s32 16, 16
      %74 = vsyncadd [#allocation5], %s73
      %s76 = sshll.u32 [#allocation6], 4
      %s77 = int_to_ptr.vmem [resolvable:$true] %s76
      %79 = dma.vmem_to_hbm [thread:$0]  %s77, 16, %s3, [#allocation5]
    $region21: #{tpu_custom_call.1} parent=1 // pred_fallthru
      _
    // Predicated region
    $region22: #{tpu_custom_call.1} parent=1 // pred_check
      _
    $region23: #{tpu_custom_call.1} parent=1 // pred_check_branch
      %81 = sbr.rel (0) target = $region25
    $region24: #{tpu_custom_call.1} parent=1 // pred_region
      %82 = dma.done [#allocation5], 16
    $region25: #{tpu_custom_call.1} parent=1 // pred_fallthru
      _
    %83 = vsyncpa [#allocation4], 1
    %84 = vsyncpa [#allocation5], 1

</llo_original>
